<compile_context>
chip_gen: v7x
topology: tpu7x:2x2x1
jax: 0.10.0
libtpu: 0.0.40
codegen_flags: <defaults>
</compile_context>

<pallas_src>
import functools

import jax
import jax.numpy as jnp
from jax import lax
from jax.experimental import pallas as pl
from jax.experimental.pallas import tpu as pltpu

SUBLANES = 8
_WIDTH_CANDIDATES = (1024, 512, 256, 128)   # lane-dense slab widths (mult. of 128)


def _ceil_div(a, b):
    return -(-a // b)


def _round_up(a, b):
    return _ceil_div(a, b) * b


@functools.lru_cache(maxsize=None)
def _tpu_config():
    """(num_core_splits, target_tile_bytes) derived from the attached TPU."""
    kind = ""
    try:
        kind = jax.devices()[0].device_kind.lower()
    except Exception:
        pass
    # Single-TensorCore-per-device chips gain nothing from a core-split axis.
    single_tc = any(t in kind for t in
                    ("v2", "v3", "v5e", "v5 lite", "v5lite",
                     "v6e", "v6 lite", "v6lite"))
    num_splits = 1 if single_tc else 2      # v4/v5p megacore and v7x: 2 TCs
    # v7x (3.2 TB/s HBM): bigger tiles to amortize the ~0.35 us per-step cost.
    tile_bytes = (4 << 20) if "7" in kind else (2 << 20)
    return num_splits, tile_bytes


# ----------------------------- kernel -------------------------------------- #

def _partial_sum_kernel(elem_fn, inner_rows, total_rows, needs_mask, *refs):
    """Accumulates per-(sublane, lane) partial sums of elem_fn(*inputs).

    The (SUBLANES, width) output block is resident across grid axis 1 (the
    reduction axis) and is the accumulator.  The block is processed in
    `inner_rows`-row chunks (~8 vregs per input per chunk), so no large f32
    intermediate is materialized in VMEM; the inner work is pure vreg-resident
    VPU adds that hide under the input DMA.
    """
    *in_refs, out_ref = refs
    block_rows = in_refs[0].shape[0]
    width = out_ref.shape[-1]

    @pl.when(pl.program_id(1) == 0)
    def _():
        out_ref[...] = jnp.zeros_like(out_ref)

    if needs_mask:
        # Row offset of this (possibly boundary / duplicated) block in the slab.
        block_idx = pl.program_id(0) * pl.num_programs(1) + pl.program_id(1)
        row0 = block_idx * block_rows

    acc = jnp.zeros((SUBLANES, width), jnp.float32)
    for c in range(block_rows // inner_rows):            # static, fully unrolled
        start = c * inner_rows
        vals = [r[start:start + inner_rows, :].astype(jnp.float32)
                for r in in_refs]
        t = elem_fn(*vals)                                # (inner_rows, width)
        if needs_mask:
            rid = row0 + (start +
                          lax.broadcasted_iota(jnp.int32, (inner_rows, 1), 0))
            t = jnp.where(rid < total_rows, t, 0.0)       # zero invalid rows
        if inner_rows == SUBLANES:
            acc = acc + t
        else:
            # Layout-trivial fold of sublane groups; elementwise vreg adds only.
            acc = acc + t.reshape(inner_rows // SUBLANES, SUBLANES, width).sum(axis=0)
    out_ref[...] += acc


def _abs_elem(pred, img):
    return jnp.abs(pred - img)


def _kl_elem(mean, logvar):
    # NOTE: jnp.expm1(logvar) - logvar would be marginally nicer numerically,
    # but exp is the guaranteed-lowered EUP primitive; VPU op count is the same.
    return mean * mean + jnp.exp(logvar) - (logvar + 1.0)


# ----------------------------- wrapper ------------------------------------- #

def _tiled_sum(elem_fn, *tensors):
    """sum(elem_fn(*tensors)) over all elements, streamed through VMEM.

    No padded copy of the inputs is written to HBM: the slab reshape is a free
    bitcast whenever numel is a multiple of the chosen lane width; ragged rows
    are handled by boundary blocks masked in-kernel; a <128-element lane tail
    is summed directly in-graph.
    """
    n = tensors[0].size
    flats = [t.reshape(-1) for t in tensors]

    width = None
    for w in _WIDTH_CANDIDATES:
        if n % w == 0 and n // w >= SUBLANES:
            width = w
            break

    tail = None
    if width is None:
        n_main = (n // 128) * 128
        if n_main // 128 < SUBLANES:
            # A few hundred elements at most: not worth a kernel launch.
            return jnp.sum(elem_fn(*[f.astype(jnp.float32) for f in flats]))
        width = 128
        # <128-element ragged tail, summed directly (tiny).
        tail = jnp.sum(elem_fn(*[f[n_main:].astype(jnp.float32) for f in flats]))
        # NOTE: this prefix slice may materialize a copy only for tensors whose
        # numel is not 128-aligned (rare for NCHW volumes).
        flats = [f[:n_main] for f in flats]
        n = n_main

    rows = n // width
    itemsize = max(f.dtype.itemsize for f in flats)
    num_core_splits, tile_bytes = _tpu_config()

    # ~8 vregs per input per inner step, independent of slab width / dtype.
    inner_rows = min(SUBLANES * max(1, 1024 // width),
                     (rows // SUBLANES) * SUBLANES)
    rows_per_tile = max(inner_rows,
                        (tile_bytes // (width * itemsize)) // inner_rows * inner_rows)
    block_rows = min(rows_per_tile, _round_up(rows, inner_rows))
    num_blocks = _ceil_div(rows, block_rows)
    num_splits = min(num_core_splits, num_blocks)
    blocks_per_split = _ceil_div(num_blocks, num_splits)
    needs_mask = (rows % block_rows != 0) or (num_splits * blocks_per_split != num_blocks)

    slabs = [f.reshape(rows, width) for f in flats]       # free bitcast reshape

    if num_splits * blocks_per_split == num_blocks:
        def in_index(c, i, bps=blocks_per_split):
            return (c * bps + i, 0)
    else:
        # Trailing grid steps re-read the last block; those rows are fully
        # masked in-kernel and contribute exactly zero.
        def in_index(c, i, bps=blocks_per_split, nb=num_blocks):
            return (jnp.minimum(c * bps + i, nb - 1), 0)

    kernel = functools.partial(_partial_sum_kernel, elem_fn,
                               inner_rows, rows, needs_mask)

    tile_nbytes = block_rows * width * itemsize
    vmem_limit = int(max(16 << 20, len(slabs) * 2 * tile_nbytes + (8 << 20)))

    partials = pl.pallas_call(
        kernel,
        out_shape=jax.ShapeDtypeStruct((num_splits * SUBLANES, width), jnp.float32),
        grid_spec=pltpu.PrefetchScalarGridSpec(
            num_scalar_prefetch=0,
            grid=(num_splits, blocks_per_split),
            in_specs=[pl.BlockSpec((block_rows, width), in_index)] * len(slabs),
            out_specs=pl.BlockSpec((SUBLANES, width), lambda c, i: (c, 0)),
        ),
        compiler_params=pltpu.CompilerParams(
            # Leading axis shards blocks across TensorCores on multi-core chips.
            # NOTE: on v7x, consider pltpu.CORE_PARALLEL here once verified in
            # xprof; "parallel" is the safe, known-good setting.
            dimension_semantics=("parallel", "arbitrary"),
            vmem_limit_bytes=vmem_limit,
        ),
    )(*slabs)

    # Tiny (<=16, width) final reduce stays inside the enclosing jit.  An
    # in-kernel scalar finalize (SMEM (1,1) output) would shave a few more us
    # for latent-sized tensors but adds lowering surface for little gain.
    total = jnp.sum(partials)
    if tail is not None:
        total = total + tail
    return total


# --------------------------- fused forward --------------------------------- #

@jax.jit
def _loss_impl(logvar, predict_image, image, post_mean, post_logvar):
    batch = predict_image.shape[0]
    n_elems = predict_image.size
    # logvar hoisted out of the kernel (exact identity):
    #   sum(|p-i|/exp(lv) + lv) = exp(-lv) * sum(|p-i|) + lv * N
    abs_sum = _tiled_sum(_abs_elem, predict_image, image)
    nll_loss = (jnp.exp(-logvar) * abs_sum + logvar * n_elems) / batch

    kl_batch = post_mean.shape[0]
    kl_sum = 0.5 * _tiled_sum(_kl_elem, post_mean, post_logvar)
    kl_loss = kl_sum / kl_batch

    return nll_loss + kl_loss, nll_loss, kl_loss


# ----------------------------- modules ------------------------------------- #

class DiagonalGaussianDistribution:
    """Minimal stand-in for the posterior object (mean / logvar, NCHW)."""

    def __init__(self, parameters):
        mean, logvar = jnp.split(parameters, 2, axis=1)
        self.mean = mean
        self.logvar = jnp.clip(logvar, -30.0, 20.0)

    def kl(self):
        # Per-sample KL (plain jnp; Loss.forward uses the fused Pallas path).
        return 0.5 * jnp.sum(
            self.mean ** 2 + jnp.exp(self.logvar) - 1.0 - self.logvar,
            axis=tuple(range(1, self.mean.ndim)))


class Loss:
    """JAX/Pallas port of diffusion4med Loss module."""

    def __init__(self, logvar_init: float = 0.0):
        # nn.Parameter(torch.ones(()) * logvar_init) -> scalar param
        self.logvar = jnp.asarray(logvar_init, dtype=jnp.float32)

    def forward(self, predict_image, image, posteriors, split: str):
        loss, nll_loss, kl_loss = _loss_impl(
            self.logvar, predict_image, image, posteriors.mean, posteriors.logvar)
        log = {
            f"{split}/total_loss": loss,
            f"{split}/logvar": self.logvar,
            f"{split}/kl_loss": kl_loss,
            f"{split}/nll_loss": nll_loss,
        }
        return loss, log


# ----------------------------- reference ----------------------------------- #

def _loss_ref(logvar, predict_image, image, posteriors):
    abs_loss = jnp.abs(predict_image - image)
    nll = abs_loss / jnp.exp(logvar) + logvar
    nll_loss = jnp.sum(nll) / nll.shape[0]
    kl = 0.5 * jnp.sum(
        posteriors.mean ** 2 + jnp.exp(posteriors.logvar) - 1.0 - posteriors.logvar,
        axis=(1, 2, 3),
    )
    kl_loss = jnp.sum(kl) / kl.shape[0]
    return nll_loss + kl_loss, nll_loss, kl_loss


# ------------------------------- main -------------------------------------- #

if __name__ == "__main__":
    key = jax.random.PRNGKey(0)
    k1, k2, k3, k4, k5 = jax.random.split(key, 5)

    B, C, H, W = 2, 4, 32, 32          # image space (NCHW)
    Cz, Hz, Wz = 4, 16, 16             # latent space (NCHW), params carry 2*Cz

    predict_image = jax.random.normal(k1, (B, C, H, W), dtype=jnp.float32)
    image = jax.random.normal(k2, (B, C, H, W), dtype=jnp.float32)
    post_params = 0.5 * jax.random.normal(k3, (B, 2 * Cz, Hz, Wz), dtype=jnp.float32)

    posteriors = DiagonalGaussianDistribution(post_params)
    loss_mod = Loss(logvar_init=0.0)

    loss, log = loss_mod.forward(predict_image, image, posteriors, split="train")
    loss = jax.block_until_ready(loss)

    ref_loss, ref_nll, ref_kl = _loss_ref(loss_mod.logvar, predict_image, image, posteriors)
    assert jnp.allclose(loss, ref_loss, rtol=1e-5, atol=1e-5), (loss, ref_loss)
    assert jnp.allclose(log["train/nll_loss"], ref_nll, rtol=1e-5, atol=1e-5)
    assert jnp.allclose(log["train/kl_loss"], ref_kl, rtol=1e-5, atol=1e-5)

    # Extra self-check: ragged size exercising boundary-block masking + tail.
    xa = jax.random.normal(k4, (3, 5, 41, 37), dtype=jnp.float32)
    xb = jax.random.normal(k5, (3, 5, 41, 37), dtype=jnp.float32)
    got = jax.block_until_ready(
        jax.jit(lambda a, b: _tiled_sum(_abs_elem, a, b))(xa, xb))
    want = jnp.sum(jnp.abs(xa - xb))
    assert jnp.allclose(got, want, rtol=1e-5, atol=1e-2), (got, want)

    print("KERNEL_OK")
</pallas_src>

<mosaic_0001>
module attributes {stable_mosaic.version = 11 : i64} {
  func.func @_partial_sum_kernel(%arg0: i32, %arg1: i32, %arg2: memref<8x1024xf32, #tpu.memory_space<vmem>>, %arg3: memref<8x1024xf32, #tpu.memory_space<vmem>>, %arg4: memref<8x1024xf32, #tpu.memory_space<vmem>>) attributes {dimension_semantics = [#tpu.dimension_semantics<parallel>, #tpu.dimension_semantics<arbitrary>], iteration_bounds = array<i64: 1, 1>, scalar_prefetch = 0 : i64, scratch_operands = 0 : i64, tpu.core_type = #tpu.core_type<tc>, window_params = [{transform_indices = @transform_0, window_bounds = array<i64: 8, 1024>}, {transform_indices = @transform_1, window_bounds = array<i64: 8, 1024>}, {transform_indices = @transform_2, window_bounds = array<i64: 8, 1024>}]} {
    %c0_i32 = arith.constant 0 : i32
    %0 = arith.cmpi eq, %arg1, %c0_i32 : i32
    %1 = arith.extui %0 : i1 to i32
    %c0_i32_0 = arith.constant 0 : i32
    %2 = arith.cmpi ne, %1, %c0_i32_0 : i32
    scf.if %2 {
      %cst_8 = arith.constant 0.000000e+00 : f32
      %12 = vector.broadcast %cst_8 : f32 to vector<8x1024xf32>
      %c0_9 = arith.constant 0 : index
      %c0_10 = arith.constant 0 : index
      %13 = vector.load %arg4[%c0_9, %c0_10] : memref<8x1024xf32, #tpu.memory_space<vmem>>, vector<8x1024xf32>
      tpu.vector_store %arg4[%c0_9, %c0_10], %12 {strides = array<i32>} : memref<8x1024xf32, #tpu.memory_space<vmem>>, vector<8x1024xf32>,
    } else {
    }
    %cst = arith.constant 0.000000e+00 : f32
    %3 = vector.broadcast %cst : f32 to vector<8x1024xf32>
    %c0 = arith.constant 0 : index
    %c0_1 = arith.constant 0 : index
    %4 = vector.load %arg2[%c0, %c0_1] : memref<8x1024xf32, #tpu.memory_space<vmem>>, vector<8x1024xf32>
    %c0_2 = arith.constant 0 : index
    %c0_3 = arith.constant 0 : index
    %5 = vector.load %arg3[%c0_2, %c0_3] : memref<8x1024xf32, #tpu.memory_space<vmem>>, vector<8x1024xf32>
    %6 = arith.subf %4, %5 : vector<8x1024xf32>
    %7 = math.absf %6 : vector<8x1024xf32>
    %8 = arith.addf %3, %7 : vector<8x1024xf32>
    %c0_4 = arith.constant 0 : index
    %c0_5 = arith.constant 0 : index
    %9 = vector.load %arg4[%c0_4, %c0_5] : memref<8x1024xf32, #tpu.memory_space<vmem>>, vector<8x1024xf32>
    %10 = arith.addf %9, %8 : vector<8x1024xf32>
    %c0_6 = arith.constant 0 : index
    %c0_7 = arith.constant 0 : index
    %11 = vector.load %arg4[%c0_6, %c0_7] : memref<8x1024xf32, #tpu.memory_space<vmem>>, vector<8x1024xf32>
    tpu.vector_store %arg4[%c0_6, %c0_7], %10 {strides = array<i32>} : memref<8x1024xf32, #tpu.memory_space<vmem>>, vector<8x1024xf32>,
    return
  }
  func.func @transform_0(%arg0: i32, %arg1: i32) -> (i32, i32) {
    %c1_i32 = arith.constant 1 : i32
    %0 = arith.muli %arg0, %c1_i32 : i32
    %1 = arith.addi %0, %arg1 : i32
    %c0_i32 = arith.constant 0 : i32
    %c0_i32_0 = arith.constant 0 : i32
    return %1, %c0_i32 : i32, i32
  }
  func.func @transform_1(%arg0: i32, %arg1: i32) -> (i32, i32) {
    %c1_i32 = arith.constant 1 : i32
    %0 = arith.muli %arg0, %c1_i32 : i32
    %1 = arith.addi %0, %arg1 : i32
    %c0_i32 = arith.constant 0 : i32
    %c0_i32_0 = arith.constant 0 : i32
    return %1, %c0_i32 : i32, i32
  }
  func.func @transform_2(%arg0: i32, %arg1: i32) -> (i32, i32) {
    %c0_i32 = arith.constant 0 : i32
    %c0_i32_0 = arith.constant 0 : i32
    return %arg0, %c0_i32 : i32, i32
  }
}

module attributes {stable_mosaic.version = 11 : i64} {
  func.func @_partial_sum_kernel(%arg0: i32, %arg1: i32, %arg2: memref<8x256xf32, #tpu.memory_space<vmem>>, %arg3: memref<8x256xf32, #tpu.memory_space<vmem>>, %arg4: memref<8x256xf32, #tpu.memory_space<vmem>>) attributes {dimension_semantics = [#tpu.dimension_semantics<parallel>, #tpu.dimension_semantics<arbitrary>], iteration_bounds = array<i64: 1, 1>, scalar_prefetch = 0 : i64, scratch_operands = 0 : i64, tpu.core_type = #tpu.core_type<tc>, window_params = [{transform_indices = @transform_0, window_bounds = array<i64: 8, 256>}, {transform_indices = @transform_1, window_bounds = array<i64: 8, 256>}, {transform_indices = @transform_2, window_bounds = array<i64: 8, 256>}]} {
    %c0_i32 = arith.constant 0 : i32
    %0 = arith.cmpi eq, %arg1, %c0_i32 : i32
    %1 = arith.extui %0 : i1 to i32
    %c0_i32_0 = arith.constant 0 : i32
    %2 = arith.cmpi ne, %1, %c0_i32_0 : i32
    scf.if %2 {
      %cst_9 = arith.constant 0.000000e+00 : f32
      %16 = vector.broadcast %cst_9 : f32 to vector<8x256xf32>
      %c0_10 = arith.constant 0 : index
      %c0_11 = arith.constant 0 : index
      %17 = vector.load %arg4[%c0_10, %c0_11] : memref<8x256xf32, #tpu.memory_space<vmem>>, vector<8x256xf32>
      tpu.vector_store %arg4[%c0_10, %c0_11], %16 {strides = array<i32>} : memref<8x256xf32, #tpu.memory_space<vmem>>, vector<8x256xf32>,
    } else {
    }
    %cst = arith.constant 0.000000e+00 : f32
    %3 = vector.broadcast %cst : f32 to vector<8x256xf32>
    %c0 = arith.constant 0 : index
    %c0_1 = arith.constant 0 : index
    %4 = vector.load %arg2[%c0, %c0_1] : memref<8x256xf32, #tpu.memory_space<vmem>>, vector<8x256xf32>
    %c0_2 = arith.constant 0 : index
    %c0_3 = arith.constant 0 : index
    %5 = vector.load %arg3[%c0_2, %c0_3] : memref<8x256xf32, #tpu.memory_space<vmem>>, vector<8x256xf32>
    %6 = arith.mulf %4, %4 : vector<8x256xf32>
    %7 = math.exp %5 : vector<8x256xf32>
    %8 = arith.addf %6, %7 : vector<8x256xf32>
    %cst_4 = arith.constant 1.000000e+00 : f32
    %9 = vector.broadcast %cst_4 : f32 to vector<8x256xf32>
    %10 = arith.addf %5, %9 : vector<8x256xf32>
    %11 = arith.subf %8, %10 : vector<8x256xf32>
    %12 = arith.addf %3, %11 : vector<8x256xf32>
    %c0_5 = arith.constant 0 : index
    %c0_6 = arith.constant 0 : index
    %13 = vector.load %arg4[%c0_5, %c0_6] : memref<8x256xf32, #tpu.memory_space<vmem>>, vector<8x256xf32>
    %14 = arith.addf %13, %12 : vector<8x256xf32>
    %c0_7 = arith.constant 0 : index
    %c0_8 = arith.constant 0 : index
    %15 = vector.load %arg4[%c0_7, %c0_8] : memref<8x256xf32, #tpu.memory_space<vmem>>, vector<8x256xf32>
    tpu.vector_store %arg4[%c0_7, %c0_8], %14 {strides = array<i32>} : memref<8x256xf32, #tpu.memory_space<vmem>>, vector<8x256xf32>,
    return
  }
  func.func @transform_0(%arg0: i32, %arg1: i32) -> (i32, i32) {
    %c1_i32 = arith.constant 1 : i32
    %0 = arith.muli %arg0, %c1_i32 : i32
    %1 = arith.addi %0, %arg1 : i32
    %c0_i32 = arith.constant 0 : i32
    %c0_i32_0 = arith.constant 0 : i32
    return %1, %c0_i32 : i32, i32
  }
  func.func @transform_1(%arg0: i32, %arg1: i32) -> (i32, i32) {
    %c1_i32 = arith.constant 1 : i32
    %0 = arith.muli %arg0, %c1_i32 : i32
    %1 = arith.addi %0, %arg1 : i32
    %c0_i32 = arith.constant 0 : i32
    %c0_i32_0 = arith.constant 0 : i32
    return %1, %c0_i32 : i32, i32
  }
  func.func @transform_2(%arg0: i32, %arg1: i32) -> (i32, i32) {
    %c0_i32 = arith.constant 0 : i32
    %c0_i32_0 = arith.constant 0 : i32
    return %arg0, %c0_i32 : i32, i32
  }
}

</mosaic_0001>

<llo_original>
// kernel: _loss_impl.2
$region0: #{_loss_impl.2}
  #allocation0 [shape = 'u32[]', space=smem, size = 0x4, offset = 0x4, fixed_abs, tag = 'smem constant byte address 0x4 - core index']
  #allocation1 [shape = 'u32[144,128]{1,0:T(1,128)}', space=vmem, size = 0x12000, scoped, tag = 'internal scratch']
  %s0 = inlined_call_operand.vmem [shape: f32[8,1024], index: 0, kind: input, shape index: {}]
  %s1 = inlined_call_operand.vmem [shape: f32[8,1024], index: 1, kind: input, shape index: {}]
  %s2 = inlined_call_operand.vmem [shape: f32[8,1024], index: 2, kind: output, shape index: {}]
  %s3 = sld [smem:[#allocation0]]
  $region22: #{_loss_impl.2} parent=0
    _
  %s5 = ssub.s32 1, %s3
  %s6 = scalar_select 0, %s5, %s3
  // Predicated region
  $region2: #{_loss_impl.2} parent=0 // pred_check
    _
  $region3: #{_loss_impl.2} parent=0 // pred_check_branch
    %8 = sbr.rel (0) target = $region5
  $region4: #{_loss_impl.2} parent=0 // pred_region
    %s9 = sadd.s32 0, 0
    %p10 = scmp.lt.s32.totalorder %s9, 0
    %s11 = scalar_select %p10, %s9, 0
    %s12 = smul.addr %s11, 8
    %s13 = smul.addr %s12, 8
    %s14 = scalar_lea.vmem %s0, %s13
    %s15 = sadd.s32 0, 0
  $region5: #{_loss_impl.2} parent=0 // pred_fallthru
    _
  // Predicated region
  $region6: #{_loss_impl.2} parent=0 // pred_check
    _
  $region7: #{_loss_impl.2} parent=0 // pred_check_branch
    %17 = sbr.rel (0) target = $region9
  $region8: #{_loss_impl.2} parent=0 // pred_region
    %s18 = sadd.s32 0, 0
    %p19 = scmp.lt.s32.totalorder %s18, 0
    %s20 = scalar_select %p19, %s18, 0
    %s21 = smul.addr %s20, 8
    %s22 = smul.addr %s21, 8
    %s23 = scalar_lea.vmem %s1, %s22
    %s24 = sadd.s32 0, 0
  $region9: #{_loss_impl.2} parent=0 // pred_fallthru
    _
  %s25 = sadd.s32 0, 0
  %p26 = scmp.lt.s32.totalorder %s25, 0
  %s27 = scalar_select %p26, %s25, 0
  %s28 = smul.addr %s27, 8
  %s29 = smul.addr %s28, 8
  %s30 = scalar_lea.vmem %s0, %s29
  %s31 = sadd.s32 0, 0
  %p32 = scmp.lt.s32.totalorder %s31, 0
  %s33 = scalar_select %p32, %s31, 0
  %s34 = smul.addr %s33, 8
  %s35 = smul.addr %s34, 8
  %s36 = scalar_lea.vmem %s1, %s35
  %s37 = sadd.s32 0, 0
  %p38 = scmp.lt.s32.totalorder %s37, 0
  %s39 = scalar_select %p38, %s37, 0
  %s40 = smul.addr %s39, 8
  %s41 = smul.addr %s40, 8
  %s42 = scalar_lea.vmem %s0, %s41
  %s43 = sadd.s32 0, 0
  %s44 = sadd.s32 0, 0
  %p45 = scmp.lt.s32.totalorder %s44, 0
  %s46 = scalar_select %p45, %s44, 0
  %s47 = smul.addr %s46, 8
  %s48 = smul.addr %s47, 8
  %s49 = scalar_lea.vmem %s1, %s48
  %s50 = sadd.s32 0, 0
  %p51 = scmp.eq.s32.totalorder 0, 0
  // Predicated region
  $region10: #{_loss_impl.2} parent=0 // pred_check
    %p52 = pneg %p51
  $region11: #{_loss_impl.2} parent=0 // pred_check_branch
    %54 = sbr.rel (%p52) target = $region13
  $region12: #{_loss_impl.2} parent=0 // pred_region
    %55 = vst [vmem:[%s2] sm:$0xff] 0.0
    %56 = vst [vmem:[%s2 + $0x8] sm:$0xff] 0.0
    %57 = vst [vmem:[%s2 + $0x10] sm:$0xff] 0.0
    %58 = vst [vmem:[%s2 + $0x18] sm:$0xff] 0.0
    %59 = vst [vmem:[%s2 + $0x20] sm:$0xff] 0.0
    %60 = vst [vmem:[%s2 + $0x28] sm:$0xff] 0.0
    %61 = vst [vmem:[%s2 + $0x30] sm:$0xff] 0.0
    %62 = vst [vmem:[%s2 + $0x38] sm:$0xff] 0.0
  $region13: #{_loss_impl.2} parent=0 // pred_fallthru
    _
  %v63 = vld [vmem:[%s42] sm:$0xff]
  %v64 = vld [vmem:[%s42 + $0x8] sm:$0xff]
  %v65 = vld [vmem:[%s42 + $0x10] sm:$0xff]
  %v66 = vld [vmem:[%s42 + $0x18] sm:$0xff]
  %v67 = vld [vmem:[%s42 + $0x20] sm:$0xff]
  %v68 = vld [vmem:[%s42 + $0x28] sm:$0xff]
  %v69 = vld [vmem:[%s42 + $0x30] sm:$0xff]
  %v70 = vld [vmem:[%s42 + $0x38] sm:$0xff]
  %v71 = vld [vmem:[%s49] sm:$0xff]
  %v72 = vld [vmem:[%s49 + $0x8] sm:$0xff]
  %v73 = vld [vmem:[%s49 + $0x10] sm:$0xff]
  %v74 = vld [vmem:[%s49 + $0x18] sm:$0xff]
  %v75 = vld [vmem:[%s49 + $0x20] sm:$0xff]
  %v76 = vld [vmem:[%s49 + $0x28] sm:$0xff]
  %v77 = vld [vmem:[%s49 + $0x30] sm:$0xff]
  %v78 = vld [vmem:[%s49 + $0x38] sm:$0xff]
  %v79 = vsub.f32 %v63, %v71
  %v80 = vsub.f32 %v64, %v72
  %v81 = vsub.f32 %v65, %v73
  %v82 = vsub.f32 %v66, %v74
  %v83 = vsub.f32 %v67, %v75
  %v84 = vsub.f32 %v68, %v76
  %v85 = vsub.f32 %v69, %v77
  %v86 = vsub.f32 %v70, %v78
  %v87 = vand.u32 2147483647, %v79
  %v88 = vand.u32 2147483647, %v80
  %v89 = vand.u32 2147483647, %v81
  %v90 = vand.u32 2147483647, %v82
  %v91 = vand.u32 2147483647, %v83
  %v92 = vand.u32 2147483647, %v84
  %v93 = vand.u32 2147483647, %v85
  %v94 = vand.u32 2147483647, %v86
  %v95 = vadd.f32 %v87, 0.0
  %v96 = vadd.f32 %v88, 0.0
  %v97 = vadd.f32 %v89, 0.0
  %v98 = vadd.f32 %v90, 0.0
  %v99 = vadd.f32 %v91, 0.0
  %v100 = vadd.f32 %v92, 0.0
  %v101 = vadd.f32 %v93, 0.0
  %v102 = vadd.f32 %v94, 0.0
  %v103 = vld [vmem:[%s2] sm:$0xff]
  %v104 = vld [vmem:[%s2 + $0x8] sm:$0xff]
  %v105 = vld [vmem:[%s2 + $0x10] sm:$0xff]
  %v106 = vld [vmem:[%s2 + $0x18] sm:$0xff]
  %v107 = vld [vmem:[%s2 + $0x20] sm:$0xff]
  %v108 = vld [vmem:[%s2 + $0x28] sm:$0xff]
  %v109 = vld [vmem:[%s2 + $0x30] sm:$0xff]
  %v110 = vld [vmem:[%s2 + $0x38] sm:$0xff]
  %v111 = vadd.f32 %v103, %v95
  %v112 = vadd.f32 %v104, %v96
  %v113 = vadd.f32 %v105, %v97
  %v114 = vadd.f32 %v106, %v98
  %v115 = vadd.f32 %v107, %v99
  %v116 = vadd.f32 %v108, %v100
  %v117 = vadd.f32 %v109, %v101
  %v118 = vadd.f32 %v110, %v102
  %119 = vst [vmem:[%s2] sm:$0xff] %v111
  %120 = vst [vmem:[%s2 + $0x8] sm:$0xff] %v112
  %121 = vst [vmem:[%s2 + $0x10] sm:$0xff] %v113
  %122 = vst [vmem:[%s2 + $0x18] sm:$0xff] %v114
  %123 = vst [vmem:[%s2 + $0x20] sm:$0xff] %v115
  %124 = vst [vmem:[%s2 + $0x28] sm:$0xff] %v116
  %125 = vst [vmem:[%s2 + $0x30] sm:$0xff] %v117
  %126 = vst [vmem:[%s2 + $0x38] sm:$0xff] %v118
  // Predicated region
  $region14: #{_loss_impl.2} parent=0 // pred_check
    _
  $region15: #{_loss_impl.2} parent=0 // pred_check_branch
    %128 = sbr.rel (0) target = $region17
  $region16: #{_loss_impl.2} parent=0 // pred_region
    _
  $region17: #{_loss_impl.2} parent=0 // pred_fallthru
    _
  // Predicated region
  $region18: #{_loss_impl.2} parent=0 // pred_check
    _
  $region19: #{_loss_impl.2} parent=0 // pred_check_branch
    %130 = sbr.rel (0) target = $region21
  $region20: #{_loss_impl.2} parent=0 // pred_region
    _
  $region21: #{_loss_impl.2} parent=0 // pred_fallthru
    _

// kernel: _loss_impl.3
$region0: #{_loss_impl.3}
  #allocation0 [shape = 'u32[]', space=smem, size = 0x4, offset = 0x4, fixed_abs, tag = 'smem constant byte address 0x4 - core index']
  #allocation1 [shape = 'u32[144,128]{1,0:T(1,128)}', space=vmem, size = 0x12000, scoped, tag = 'internal scratch']
  %s0 = inlined_call_operand.vmem [shape: f32[8,256], index: 0, kind: input, shape index: {}]
  %s1 = inlined_call_operand.vmem [shape: f32[8,256], index: 1, kind: input, shape index: {}]
  %s2 = inlined_call_operand.vmem [shape: f32[8,256], index: 2, kind: output, shape index: {}]
  %s3 = sld [smem:[#allocation0]]
  $region22: #{_loss_impl.3} parent=0
    _
  %s5 = ssub.s32 1, %s3
  %s6 = scalar_select 0, %s5, %s3
  // Predicated region
  $region2: #{_loss_impl.3} parent=0 // pred_check
    _
  $region3: #{_loss_impl.3} parent=0 // pred_check_branch
    %8 = sbr.rel (0) target = $region5
  $region4: #{_loss_impl.3} parent=0 // pred_region
    %s9 = sadd.s32 0, 0
    %p10 = scmp.lt.s32.totalorder %s9, 0
    %s11 = scalar_select %p10, %s9, 0
    %s12 = smul.addr %s11, 2
    %s13 = smul.addr %s12, 8
    %s14 = scalar_lea.vmem %s0, %s13
    %s15 = sadd.s32 0, 0
  $region5: #{_loss_impl.3} parent=0 // pred_fallthru
    _
  // Predicated region
  $region6: #{_loss_impl.3} parent=0 // pred_check
    _
  $region7: #{_loss_impl.3} parent=0 // pred_check_branch
    %17 = sbr.rel (0) target = $region9
  $region8: #{_loss_impl.3} parent=0 // pred_region
    %s18 = sadd.s32 0, 0
    %p19 = scmp.lt.s32.totalorder %s18, 0
    %s20 = scalar_select %p19, %s18, 0
    %s21 = smul.addr %s20, 2
    %s22 = smul.addr %s21, 8
    %s23 = scalar_lea.vmem %s1, %s22
    %s24 = sadd.s32 0, 0
  $region9: #{_loss_impl.3} parent=0 // pred_fallthru
    _
  %s25 = sadd.s32 0, 0
  %p26 = scmp.lt.s32.totalorder %s25, 0
  %s27 = scalar_select %p26, %s25, 0
  %s28 = smul.addr %s27, 2
  %s29 = smul.addr %s28, 8
  %s30 = scalar_lea.vmem %s0, %s29
  %s31 = sadd.s32 0, 0
  %p32 = scmp.lt.s32.totalorder %s31, 0
  %s33 = scalar_select %p32, %s31, 0
  %s34 = smul.addr %s33, 2
  %s35 = smul.addr %s34, 8
  %s36 = scalar_lea.vmem %s1, %s35
  %s37 = sadd.s32 0, 0
  %p38 = scmp.lt.s32.totalorder %s37, 0
  %s39 = scalar_select %p38, %s37, 0
  %s40 = smul.addr %s39, 2
  %s41 = smul.addr %s40, 8
  %s42 = scalar_lea.vmem %s0, %s41
  %s43 = sadd.s32 0, 0
  %s44 = sadd.s32 0, 0
  %p45 = scmp.lt.s32.totalorder %s44, 0
  %s46 = scalar_select %p45, %s44, 0
  %s47 = smul.addr %s46, 2
  %s48 = smul.addr %s47, 8
  %s49 = scalar_lea.vmem %s1, %s48
  %s50 = sadd.s32 0, 0
  %p51 = scmp.eq.s32.totalorder 0, 0
  // Predicated region
  $region10: #{_loss_impl.3} parent=0 // pred_check
    %p52 = pneg %p51
  $region11: #{_loss_impl.3} parent=0 // pred_check_branch
    %54 = sbr.rel (%p52) target = $region13
  $region12: #{_loss_impl.3} parent=0 // pred_region
    %55 = vst [vmem:[%s2] sm:$0xff] 0.0
    %56 = vst [vmem:[%s2 + $0x8] sm:$0xff] 0.0
  $region13: #{_loss_impl.3} parent=0 // pred_fallthru
    _
  %v57 = vld [vmem:[%s42] sm:$0xff]
  %v58 = vld [vmem:[%s42 + $0x8] sm:$0xff]
  %v59 = vld [vmem:[%s49] sm:$0xff]
  %v60 = vld [vmem:[%s49 + $0x8] sm:$0xff]
  %v61 = vmul.f32 %v57, %v57
  %v62 = vmul.f32 %v58, %v58
  %v63 = vmul.f32 %v59, 1.442695
  %v64 = vpow.pop %v63
  %v65 = vmul.f32 %v60, 1.442695
  %v66 = vpow.pop %v65
  %v67 = vadd.f32 %v61, %v64
  %v68 = vadd.f32 %v62, %v66
  %v69 = vadd.f32 %v59, 1.0
  %v70 = vadd.f32 %v60, 1.0
  %v71 = vsub.f32 %v67, %v69
  %v72 = vsub.f32 %v68, %v70
  %v73 = vadd.f32 %v71, 0.0
  %v74 = vadd.f32 %v72, 0.0
  %v75 = vld [vmem:[%s2] sm:$0xff]
  %v76 = vld [vmem:[%s2 + $0x8] sm:$0xff]
  %v77 = vadd.f32 %v75, %v73
  %v78 = vadd.f32 %v76, %v74
  %79 = vst [vmem:[%s2] sm:$0xff] %v77
  %80 = vst [vmem:[%s2 + $0x8] sm:$0xff] %v78
  // Predicated region
  $region14: #{_loss_impl.3} parent=0 // pred_check
    _
  $region15: #{_loss_impl.3} parent=0 // pred_check_branch
    %82 = sbr.rel (0) target = $region17
  $region16: #{_loss_impl.3} parent=0 // pred_region
    _
  $region17: #{_loss_impl.3} parent=0 // pred_fallthru
    _
  // Predicated region
  $region18: #{_loss_impl.3} parent=0 // pred_check
    _
  $region19: #{_loss_impl.3} parent=0 // pred_check_branch
    %84 = sbr.rel (0) target = $region21
  $region20: #{_loss_impl.3} parent=0 // pred_region
    _
  $region21: #{_loss_impl.3} parent=0 // pred_fallthru
    _

</llo_original>
